<compile_context>
chip_gen: v5e
topology: v5e:2x2
jax: 0.10.0
libtpu: 0.0.40
codegen_flags: <defaults>
</compile_context>

<pallas_src>
import functools

import jax
import jax.numpy as jnp
from jax.experimental import pallas as pl
from jax.experimental.pallas import tpu as pltpu


def _round_up(x, m):
    return ((x + m - 1) // m) * m


def gcn_kernel(a_ref, hw_ref, b_ref, o_ref, *acc, tk, n_valid, mask_k_tail):
    # a_ref  : (TM, TK)  adjacency tile, native dtype (cast to bf16 here)
    # hw_ref : (Nk, DP)  H @ W^T, bf16, fully VMEM-resident (constant index)
    # b_ref  : (1,  DP)  f32 bias (zero-padded to DP lanes)
    # o_ref  : (TM, DP)  output tile, resident across the K axis
    # acc    : optional f32 scratch (only when o_ref dtype is not f32)
    acc_ref = acc[0] if acc else o_ref
    k = pl.program_id(1)

    @pl.when(k == 0)
    def _():
        acc_ref[...] = jnp.zeros_like(acc_ref)

    a = a_ref[...]
    if mask_k_tail:
        # Last K tile may extend past N: zero the out-of-range columns so the
        # unspecified padded reads of A cannot pollute the accumulation.
        col = jax.lax.broadcasted_iota(jnp.int32, a.shape, 1) + k * tk
        a = jnp.where(col < n_valid, a, 0)
    a = a.astype(jnp.bfloat16)

    start = pl.multiple_of(k * tk, 128)
    hw = hw_ref[pl.ds(start, tk), :]

    acc_ref[...] += jnp.dot(a, hw, preferred_element_type=jnp.float32)

    @pl.when(k == pl.num_programs(1) - 1)
    def _():
        y = acc_ref[...] + b_ref[...]          # f32 epilogue: bias + ReLU
        o_ref[...] = jnp.maximum(y, 0.0).astype(o_ref.dtype)


def gcn_layer(A, H, W, b, *, tm=None, tk=None,
              vmem_budget_bytes=32 * 1024 * 1024):
    """ReLU(Linear(A @ H)) — W is the PyTorch Linear weight [Dout, Din]."""
    N = A.shape[0]
    Din = H.shape[1]
    Dout = W.shape[0]
    assert A.shape == (N, N) and H.shape == (N, Din)
    assert W.shape == (Dout, Din) and b.shape == (Dout,)

    out_dtype = H.dtype
    a_bytes = jnp.dtype(A.dtype).itemsize

    # --- Reassociate: (A @ H) @ W^T == A @ (H @ W^T). Tiny matmul in XLA. ---
    HW = jnp.dot(H.astype(jnp.float32), W.astype(jnp.float32).T,
                 preferred_element_type=jnp.float32)          # [N, Dout]

    # --- Lane-dense feature axis: pad Dout to a multiple of 128. ---
    DP = _round_up(max(Dout, 128), 128)
    b2 = jnp.pad(b.astype(jnp.float32), (0, DP - Dout)).reshape(1, DP)

    # --- Tile sizes. Row tile >= 128 (MXU height, >=2 row blocks for the
    #     v7x parallel axis when N allows); K tile as large as the VMEM
    #     budget permits (whole K axis in one step for moderate N). ---
    if tm is None:
        tm = 256 if N >= 512 else 128
    Nm = _round_up(N, tm)

    if tk is None:
        hw_bytes = 2 * _round_up(N, 128) * DP * 2      # resident HW (x2 safety)
        out_bytes = 2 * tm * DP * 4                    # output / acc block
        per_col = tm * (3 * a_bytes + 2)               # A dbl-buf + bf16 copy
        avail = max(vmem_budget_bytes - hw_bytes - out_bytes - (1 << 20),
                    per_col * 128)
        tk = max(128, min(_round_up(N, 128), 4096,
                          (avail // per_col) // 128 * 128))
    Nk = _round_up(N, tk)
    mask_k_tail = (N % tk) != 0

    # HW is tiny (Nk x DP bf16) — pad + cast in the wrapper is negligible and
    # guarantees the resident block has no unspecified rows.
    # TODO(synk): for very large N (HW no longer VMEM-resident) fall back to a
    # K-tiled HW BlockSpec.
    HW_p = jnp.pad(HW, ((0, Nk - N), (0, DP - Dout))).astype(jnp.bfloat16)

    grid = (Nm // tm, Nk // tk)

    # f32 outputs accumulate directly in the resident output block; only
    # low-precision outputs need an f32 scratch accumulator.
    use_scratch = jnp.dtype(out_dtype) != jnp.dtype(jnp.float32)
    scratch = [pltpu.VMEM((tm, DP), jnp.float32)] if use_scratch else []

    kernel = functools.partial(gcn_kernel, tk=tk, n_valid=N,
                               mask_k_tail=mask_k_tail)

    cost = pl.CostEstimate(
        flops=2 * N * N * DP,
        transcendentals=0,
        bytes_accessed=N * N * a_bytes + Nk * DP * 2
        + Nm * DP * jnp.dtype(out_dtype).itemsize,
    )

    out_padded = pl.pallas_call(
        kernel,
        out_shape=jax.ShapeDtypeStruct((Nm, DP), out_dtype),
        grid_spec=pltpu.PrefetchScalarGridSpec(
            num_scalar_prefetch=0,
            grid=grid,
            in_specs=[
                pl.BlockSpec((tm, tk), lambda i, k: (i, k)),   # A (native dtype)
                pl.BlockSpec((Nk, DP), lambda i, k: (0, 0)),   # HW, resident
                pl.BlockSpec((1, DP), lambda i, k: (0, 0)),    # bias, resident
            ],
            out_specs=pl.BlockSpec((tm, DP), lambda i, k: (i, 0)),
            scratch_shapes=scratch,
        ),
        compiler_params=pltpu.CompilerParams(
            dimension_semantics=("parallel", "arbitrary"),
            vmem_limit_bytes=48 * 1024 * 1024),
        cost_estimate=cost,
    )(A, HW_p, b2)

    return out_padded[:N, :Dout]


if __name__ == "__main__":
    def make_graph(key, N, Din, Dout):
        k_a, k_h, k_w, k_b = jax.random.split(key, 4)
        A_raw = (jax.random.uniform(k_a, (N, N)) > 0.8).astype(jnp.float32)
        A = A_raw + jnp.eye(N, dtype=jnp.float32)      # self loops
        A = A / jnp.sum(A, axis=1, keepdims=True)      # row-normalize
        H = jax.random.normal(k_h, (N, Din), dtype=jnp.float32)
        bound = 1.0 / (Din ** 0.5)                     # nn.Linear default init
        W = jax.random.uniform(k_w, (Dout, Din), minval=-bound, maxval=bound,
                               dtype=jnp.float32)
        b = jax.random.uniform(k_b, (Dout,), minval=-bound, maxval=bound,
                               dtype=jnp.float32)
        return A, H, W, b

    key = jax.random.PRNGKey(0)
    k1, k2 = jax.random.split(key)

    # --- Test 1: default tiles (single K step, accumulate-in-output path). ---
    N, Din, Dout = 256, 64, 32
    A, H, W, b = make_graph(k1, N, Din, Dout)
    out = jax.block_until_ready(gcn_layer(A, H, W, b))
    ref = jnp.maximum((A @ H) @ W.T + b, 0.0)
    assert out.shape == (N, Dout) and out.dtype == H.dtype
    assert jnp.allclose(out, ref, atol=2e-2, rtol=2e-2), float(
        jnp.max(jnp.abs(out - ref)))

    # --- Test 2: N not a tile multiple, small explicit tiles (multi-step K
    #     accumulation + in-kernel K-tail masking + padded output rows). ---
    N2, Din2, Dout2 = 320, 48, 24
    A2, H2, W2, b2 = make_graph(k2, N2, Din2, Dout2)
    out2 = jax.block_until_ready(gcn_layer(A2, H2, W2, b2, tm=128, tk=128))
    ref2 = jnp.maximum((A2 @ H2) @ W2.T + b2, 0.0)
    assert out2.shape == (N2, Dout2)
    assert jnp.allclose(out2, ref2, atol=2e-2, rtol=2e-2), float(
        jnp.max(jnp.abs(out2 - ref2)))

    # --- Test 3: bf16 features -> bf16 output (f32 scratch accumulator). ---
    out3 = jax.block_until_ready(
        gcn_layer(A2, H2.astype(jnp.bfloat16), W2, b2, tm=128, tk=128))
    assert out3.dtype == jnp.bfloat16
    assert jnp.allclose(out3.astype(jnp.float32), ref2, atol=5e-2, rtol=5e-2)

    print("KERNEL_OK")
</pallas_src>

<mosaic_0001>
module attributes {stable_mosaic.version = 11 : i64} {
  func.func @gcn_kernel(%arg0: i32, %arg1: i32, %arg2: memref<128x256xf32, #tpu.memory_space<vmem>>, %arg3: memref<256x128xbf16, #tpu.memory_space<vmem>>, %arg4: memref<1x128xf32, #tpu.memory_space<vmem>>, %arg5: memref<128x128xf32, #tpu.memory_space<vmem>>) attributes {dimension_semantics = [#tpu.dimension_semantics<parallel>, #tpu.dimension_semantics<arbitrary>], iteration_bounds = array<i64: 2, 1>, scalar_prefetch = 0 : i64, scratch_operands = 0 : i64, tpu.core_type = #tpu.core_type<tc>, window_params = [{transform_indices = @transform_0, window_bounds = array<i64: 128, 256>}, {pipeline_mode = #tpu.pipeline_mode<synchronous>, transform_indices = @transform_1, window_bounds = array<i64: 256, 128>}, {pipeline_mode = #tpu.pipeline_mode<synchronous>, transform_indices = @transform_2, window_bounds = array<i64: 1, 128>}, {transform_indices = @transform_3, window_bounds = array<i64: 128, 128>}]} {
    %c0_i32 = arith.constant 0 : i32
    %0 = arith.cmpi eq, %arg1, %c0_i32 : i32
    %1 = arith.extui %0 : i1 to i32
    %c0_i32_0 = arith.constant 0 : i32
    %2 = arith.cmpi ne, %1, %c0_i32_0 : i32
    scf.if %2 {
      %cst_9 = arith.constant 0.000000e+00 : f32
      %16 = vector.broadcast %cst_9 : f32 to vector<128x128xf32>
      %c0_10 = arith.constant 0 : index
      %c0_11 = arith.constant 0 : index
      %17 = vector.load %arg5[%c0_10, %c0_11] : memref<128x128xf32, #tpu.memory_space<vmem>>, vector<128x128xf32>
      tpu.vector_store %arg5[%c0_10, %c0_11], %16 {strides = array<i32>} : memref<128x128xf32, #tpu.memory_space<vmem>>, vector<128x128xf32>,
    } else {
    }
    %c0 = arith.constant 0 : index
    %c0_1 = arith.constant 0 : index
    %3 = vector.load %arg2[%c0, %c0_1] : memref<128x256xf32, #tpu.memory_space<vmem>>, vector<128x256xf32>
    %4 = arith.truncf %3 : vector<128x256xf32> to vector<128x256xbf16>
    %c256_i32 = arith.constant 256 : i32
    %5 = arith.muli %arg1, %c256_i32 : i32
    %6 = tpu.assume_multiple %5, 128 : i32
    %7 = arith.index_cast %6 : i32 to index
    %c0_2 = arith.constant 0 : index
    %8 = vector.load %arg3[%7, %c0_2] : memref<256x128xbf16, #tpu.memory_space<vmem>>, vector<256x128xbf16>
    %c0_3 = arith.constant 0 : index
    %c0_4 = arith.constant 0 : index
    %9 = vector.load %arg5[%c0_3, %c0_4] : memref<128x128xf32, #tpu.memory_space<vmem>>, vector<128x128xf32>
    %cst = arith.constant dense<0.000000e+00> : vector<128x128xf32>
    %10 = tpu.matmul %4, %8, %cst {dimension_numbers = #tpu.dot_dimension_numbers<[1], [0], [0], [1], [0, 0, 1, 1], [], []>} : vector<128x256xbf16>, vector<256x128xbf16>, vector<128x128xf32> -> vector<128x128xf32>
    %11 = arith.addf %9, %10 : vector<128x128xf32>
    %c0_5 = arith.constant 0 : index
    %c0_6 = arith.constant 0 : index
    %12 = vector.load %arg5[%c0_5, %c0_6] : memref<128x128xf32, #tpu.memory_space<vmem>>, vector<128x128xf32>
    tpu.vector_store %arg5[%c0_5, %c0_6], %11 {strides = array<i32>} : memref<128x128xf32, #tpu.memory_space<vmem>>, vector<128x128xf32>,
    %c0_i32_7 = arith.constant 0 : i32
    %13 = arith.cmpi eq, %arg1, %c0_i32_7 : i32
    %14 = arith.extui %13 : i1 to i32
    %c0_i32_8 = arith.constant 0 : i32
    %15 = arith.cmpi ne, %14, %c0_i32_8 : i32
    scf.if %15 {
      %c0_9 = arith.constant 0 : index
      %c0_10 = arith.constant 0 : index
      %16 = vector.load %arg5[%c0_9, %c0_10] : memref<128x128xf32, #tpu.memory_space<vmem>>, vector<128x128xf32>
      %c0_11 = arith.constant 0 : index
      %c0_12 = arith.constant 0 : index
      %17 = vector.load %arg4[%c0_11, %c0_12] : memref<1x128xf32, #tpu.memory_space<vmem>>, vector<1x128xf32>
      %18 = vector.broadcast %17 : vector<1x128xf32> to vector<128x128xf32>
      %19 = arith.addf %16, %18 : vector<128x128xf32>
      %cst_13 = arith.constant 0.000000e+00 : f32
      %20 = vector.broadcast %cst_13 : f32 to vector<128x128xf32>
      %21 = arith.maximumf %19, %20 : vector<128x128xf32>
      %c0_14 = arith.constant 0 : index
      %c0_15 = arith.constant 0 : index
      %22 = vector.load %arg5[%c0_14, %c0_15] : memref<128x128xf32, #tpu.memory_space<vmem>>, vector<128x128xf32>
      tpu.vector_store %arg5[%c0_14, %c0_15], %21 {strides = array<i32>} : memref<128x128xf32, #tpu.memory_space<vmem>>, vector<128x128xf32>,
    } else {
    }
    return
  }
  func.func @transform_0(%arg0: i32, %arg1: i32) -> (i32, i32) {
    %c0_i32 = arith.constant 0 : i32
    return %arg0, %arg1 : i32, i32
  }
  func.func @transform_1(%arg0: i32, %arg1: i32) -> (i32, i32) {
    %c0_i32 = arith.constant 0 : i32
    %c0_i32_0 = arith.constant 0 : i32
    %c0_i32_1 = arith.constant 0 : i32
    return %c0_i32, %c0_i32_0 : i32, i32
  }
  func.func @transform_2(%arg0: i32, %arg1: i32) -> (i32, i32) {
    %c0_i32 = arith.constant 0 : i32
    %c0_i32_0 = arith.constant 0 : i32
    %c0_i32_1 = arith.constant 0 : i32
    return %c0_i32, %c0_i32_0 : i32, i32
  }
  func.func @transform_3(%arg0: i32, %arg1: i32) -> (i32, i32) {
    %c0_i32 = arith.constant 0 : i32
    %c0_i32_0 = arith.constant 0 : i32
    return %arg0, %c0_i32 : i32, i32
  }
}

</mosaic_0001>

<llo_original>
// kernel: tpu_custom_call.1
$region0: #{tpu_custom_call.1}
  #allocation0 [shape = 'u32[]', space=smem, size = 0x4, offset = 0x4, fixed_abs, tag = 'smem constant byte address 0x4 - core index']
  #allocation1 [shape = 'u32[72,128]{1,0:T(1,128)}', space=vmem, size = 0x9000, scoped, tag = 'internal scratch']
  %s0 = inlined_call_operand.hbm [shape: f32[256,256], index: 0, kind: input, shape index: {}]
  %s1 = inlined_call_operand.hbm [shape: bf16[256,128], index: 1, kind: input, shape index: {}]
  %s2 = inlined_call_operand.vmem [shape: f32[1,128], index: 2, kind: input, shape index: {}]
  %s3 = inlined_call_operand.hbm [shape: f32[256,128], index: 3, kind: output, shape index: {}]
  %s4 = sld [smem:[#allocation0]]
  $region61: #{tpu_custom_call.1} parent=0
    _
  %s6 = ssub.s32 1, %s4
  %s7 = scalar_select 0, %s6, %s4
  $region1: #{tpu_custom_call.1} parent=0
    #allocation2 [shape = 'u8[262144]{0}', space=vmem, size = 0x40000, scoped, tag = 'input window, operand 0']
    #allocation3 [shape = 's32[2]{0}', space=sflag, size = 0x8, scoped, tag = 'scoped memory for tpu_custom_call.1']
    #allocation4 [shape = 's32[2]{0}', space=sflag, size = 0x8, scoped, tag = 'scoped memory for tpu_custom_call.1']
    #allocation5 [shape = 'u8[65536]{0}', space=vmem, size = 0x10000, scoped, tag = 'input window, operand 1, single buffered']
    #allocation6 [shape = 's32[1]{0}', space=sflag, size = 0x4, scoped, tag = 'scoped memory for tpu_custom_call.1']
    #allocation7 [shape = 'u8[131072]{0}', space=vmem, size = 0x20000, scoped, tag = 'output window, operand 0']
    %8 = vsyncpa [#allocation3], 0
    %s9 = scalar_lea.sflag [#allocation3], 1
    %10 = vsyncpa %s9, 0
    %11 = vsyncpa [#allocation6], 0
    %12 = vsyncpa [#allocation4], 0
    %s13 = scalar_lea.sflag [#allocation4], 1
    %14 = vsyncpa %s13, 0
    loop: start=0, step=1, limit=4
    $region2: #{tpu_custom_call.1} parent=1 // loop_pre_header
      _
    $region3: #{tpu_custom_call.1} parent=1 // loop_header
      %s16 = sphi 0, %s20
      %p17 = scmp.ge.s32.totalorder %s16, 4
      %s23 = sphi 0, %s35
      %s24 = sphi 0, %s31
      %s25 = sphi 0, %s23
      %s26 = sphi 0, %s24
      %s27 = sphi 0, %s25
      %s28 = sphi 0, %s26
      %s40 = sphi 0, %s42
      %s43 = sphi 0, %s40
      %s44 = sphi 0, %s43
      %s60 = sphi 0, %s44
      %s64 = sphi 0, %s64
      %s66 = sphi 0, %s64
      %s67 = sphi 0, %s66
      %s81 = sphi 0, %s67
      %s85 = sphi 0, %s85
      %s87 = sphi 0, %s85
      %s88 = sphi 0, %s87
      %s102 = sphi 0, %s88
      %s108 = sphi 0, %s110
      %s111 = sphi 0, %s108
      %s112 = sphi 0, %s111
      %s128 = sphi 0, %s112
    $region4: #{tpu_custom_call.1} parent=1 // loop_header_branch
      %19 = sbr.rel (%p17) target = $region8
    $region5: #{tpu_custom_call.1} parent=1 // loop_body
      %s21 = ssub.s32 %s16, 1
      %s22 = ssub.s32 %s16, 2
      %s29 = sadd.s32 1, %s24
      %p30 = scmp.ge.s32.totalorder %s29, 1
      %s31 = scalar_select %p30, 0, %s29
      %s32 = sadd.s32 1, %s23
      %s33 = scalar_select %p30, %s32, %s23
      %p34 = scmp.ge.s32.totalorder %s33, 2
      %s35 = scalar_select %p34, 0, %s33
      %s36 = ssub.s32 %s23, %s35
      %s37 = ssub.s32 %s24, %s31
      %s38 = sor.u32 %s36, %s37
      %p39 = scmp.eq.s32.totalorder %s38, 0
      %s41 = sadd.s32 %s40, 1
      %s42 = scalar_select %p39, %s40, %s41
      %p45 = pneg %p39
      %p46 = scmp.eq.s32.totalorder %s16, 1
      %p47 = por %p45, %p46
      %p48 = scmp.ne.s32.totalorder %s40, %s43
      %p49 = scmp.eq.s32.totalorder %s16, 0
      %p50 = por %p48, %p49
      %p51 = scmp.ne.s32.totalorder %s40, %s43
      %p52 = scmp.eq.s32.totalorder %s21, 1
      %p53 = por %p51, %p52
      %p54 = scmp.ne.s32.totalorder %s43, %s44
      %p55 = scmp.eq.s32.totalorder %s21, 0
      %p56 = por %p54, %p55
      %p57 = scmp.ne.s32.totalorder %s43, %s44
      %p58 = scmp.eq.s32.totalorder %s22, 1
      %p59 = por %p57, %p58
      %p61 = scmp.ne.s32.totalorder %s44, %s60
      %p62 = scmp.eq.s32.totalorder %s22, 0
      %p63 = por %p61, %p62
      %s65 = sadd.s32 %s64, 1
      %p68 = scmp.eq.s32.totalorder %s16, 1
      %p69 = scmp.ne.s32.totalorder %s64, %s66
      %p70 = scmp.eq.s32.totalorder %s16, 0
      %p71 = por %p69, %p70
      %p72 = scmp.ne.s32.totalorder %s64, %s66
      %p73 = scmp.eq.s32.totalorder %s21, 1
      %p74 = por %p72, %p73
      %p75 = scmp.ne.s32.totalorder %s66, %s67
      %p76 = scmp.eq.s32.totalorder %s21, 0
      %p77 = por %p75, %p76
      %p78 = scmp.ne.s32.totalorder %s66, %s67
      %p79 = scmp.eq.s32.totalorder %s22, 1
      %p80 = por %p78, %p79
      %p82 = scmp.ne.s32.totalorder %s67, %s81
      %p83 = scmp.eq.s32.totalorder %s22, 0
      %p84 = por %p82, %p83
      %s86 = sadd.s32 %s85, 1
      %p89 = scmp.eq.s32.totalorder %s16, 1
      %p90 = scmp.ne.s32.totalorder %s85, %s87
      %p91 = scmp.eq.s32.totalorder %s16, 0
      %p92 = por %p90, %p91
      %p93 = scmp.ne.s32.totalorder %s85, %s87
      %p94 = scmp.eq.s32.totalorder %s21, 1
      %p95 = por %p93, %p94
      %p96 = scmp.ne.s32.totalorder %s87, %s88
      %p97 = scmp.eq.s32.totalorder %s21, 0
      %p98 = por %p96, %p97
      %p99 = scmp.ne.s32.totalorder %s87, %s88
      %p100 = scmp.eq.s32.totalorder %s22, 1
      %p101 = por %p99, %p100
      %p103 = scmp.ne.s32.totalorder %s88, %s102
      %p104 = scmp.eq.s32.totalorder %s22, 0
      %p105 = por %p103, %p104
      %s106 = ssub.s32 %s23, %s35
      %p107 = scmp.eq.s32.totalorder %s106, 0
      %s109 = sadd.s32 %s108, 1
      %s110 = scalar_select %p107, %s108, %s109
      %p113 = pneg %p107
      %p114 = scmp.eq.s32.totalorder %s16, 1
      %p115 = por %p113, %p114
      %p116 = scmp.ne.s32.totalorder %s108, %s111
      %p117 = scmp.eq.s32.totalorder %s16, 0
      %p118 = por %p116, %p117
      %p119 = scmp.ne.s32.totalorder %s108, %s111
      %p120 = scmp.eq.s32.totalorder %s21, 1
      %p121 = por %p119, %p120
      %p122 = scmp.ne.s32.totalorder %s111, %s112
      %p123 = scmp.eq.s32.totalorder %s21, 0
      %p124 = por %p122, %p123
      %p125 = scmp.ne.s32.totalorder %s111, %s112
      %p126 = scmp.eq.s32.totalorder %s22, 1
      %p127 = por %p125, %p126
      %p129 = scmp.ne.s32.totalorder %s112, %s128
      %p130 = scmp.eq.s32.totalorder %s22, 0
      %p131 = por %p129, %p130
      %p132 = scmp.le.s32.totalorder 1, %s16
      %p133 = scmp.lt.s32.totalorder %s16, 3
      %p134 = pnand %p132, %p133
      %p135 = pneg %p134
      // Predicated region
      $region9: #{tpu_custom_call.1} parent=5 // pred_check
        _
      $region10: #{tpu_custom_call.1} parent=5 // pred_check_branch
        %137 = sbr.rel (%p134) target = $region12
      $region11: #{tpu_custom_call.1} parent=5 // pred_region
        %s138 = ssub.s32 %s16, 1
        // Predicated region
        $region13: #{tpu_custom_call.1} parent=11 // pred_check
          %p139 = pneg %p77
        $region14: #{tpu_custom_call.1} parent=11 // pred_check_branch
          %141 = sbr.rel (%p139) target = $region16
        $region15: #{tpu_custom_call.1} parent=11 // pred_region
          %143 = vsyncadd [#allocation6], 0
          %s144 = sshll.u32 %s1, 4
          %s145 = int_to_ptr.hbm [resolvable:$true] %s144
          %s146 = sshll.u32 [#allocation5], 4
          %s147 = int_to_ptr.vmem [resolvable:$true] %s146
          %152 = dma.hbm_to_vmem [thread:$0]  %s145, 2048, %s147, [#allocation6], 64, 64, 4
        $region16: #{tpu_custom_call.1} parent=11 // pred_fallthru
          _
        // Predicated region
        $region17: #{tpu_custom_call.1} parent=11 // pred_check
          %p153 = pneg %p98
        $region18: #{tpu_custom_call.1} parent=11 // pred_check_branch
          %155 = sbr.rel (%p153) target = $region20
        $region19: #{tpu_custom_call.1} parent=11 // pred_region
          _
        $region20: #{tpu_custom_call.1} parent=11 // pred_fallthru
          _
      $region12: #{tpu_custom_call.1} parent=5 // pred_fallthru
        _
      %p156 = scmp.lt.s32.totalorder %s16, 2
      // Predicated region
      $region21: #{tpu_custom_call.1} parent=5 // pred_check
        %p157 = pneg %p156
      $region22: #{tpu_custom_call.1} parent=5 // pred_check_branch
        %159 = sbr.rel (%p157) target = $region24
      $region23: #{tpu_custom_call.1} parent=5 // pred_region
        // Predicated region
        $region25: #{tpu_custom_call.1} parent=23 // pred_check
          %p160 = pneg %p50
        $region26: #{tpu_custom_call.1} parent=23 // pred_check_branch
          %162 = sbr.rel (%p160) target = $region28
        $region27: #{tpu_custom_call.1} parent=23 // pred_region
          %s163 = sand.u32 %s40, 1
          %s164 = scalar_lea.sflag [#allocation3], %s163
          %s165 = sand.u32 %s40, 1
          %s166 = smul.addr %s165, 256
          %s167 = scalar_lea.vmem [#allocation2], %s166
          %s168 = smul.u32 16, %s23
          %s169 = smul.u32 2, %s24
          %171 = vsyncadd %s164, 0
          %s172 = smul.addr %s168, 2
          %s173 = sadd.s32 %s169, %s172
          %s174 = smul.addr %s173, 8
          %s175 = scalar_lea.hbm %s0, %s174
          %s176 = sshll.u32 %s175, 4
          %s177 = int_to_ptr.hbm [resolvable:$true] %s176
          %s178 = sshll.u32 %s167, 4
          %s179 = int_to_ptr.vmem [resolvable:$true] %s178
          %184 = dma.hbm_to_vmem [thread:$0]  %s177, 4096, %s179, %s164, 256, 256, 16
        $region28: #{tpu_custom_call.1} parent=23 // pred_fallthru
          _
      $region24: #{tpu_custom_call.1} parent=5 // pred_fallthru
        _
      %p185 = scmp.le.s32.totalorder 1, %s16
      %p186 = scmp.lt.s32.totalorder %s16, 3
      %p187 = pnand %p185, %p186
      %p188 = pneg %p187
      // Predicated region
      $region29: #{tpu_custom_call.1} parent=5 // pred_check
        _
      $region30: #{tpu_custom_call.1} parent=5 // pred_check_branch
        %190 = sbr.rel (%p187) target = $region32
      $region31: #{tpu_custom_call.1} parent=5 // pred_region
        %s191 = ssub.s32 %s16, 1
        %s192 = sand.u32 %s43, 1
        %s193 = scalar_lea.sflag [#allocation3], %s192
        %s194 = sand.u32 %s43, 1
        %s195 = smul.addr %s194, 256
        %s196 = scalar_lea.vmem [#allocation2], %s195
        // Predicated region
        $region33: #{tpu_custom_call.1} parent=31 // pred_check
          %p197 = pneg %p56
        $region34: #{tpu_custom_call.1} parent=31 // pred_check_branch
          %199 = sbr.rel (%p197) target = $region36
        $region35: #{tpu_custom_call.1} parent=31 // pred_region
          %201 = dma.done %s193, 4096
        $region36: #{tpu_custom_call.1} parent=31 // pred_fallthru
          _
        // Predicated region
        $region37: #{tpu_custom_call.1} parent=31 // pred_check
          %p202 = pneg %p77
        $region38: #{tpu_custom_call.1} parent=31 // pred_check_branch
          %204 = sbr.rel (%p202) target = $region40
        $region39: #{tpu_custom_call.1} parent=31 // pred_region
          %206 = dma.done [#allocation6], 2048
        $region40: #{tpu_custom_call.1} parent=31 // pred_fallthru
          _
        %s207 = sand.u32 %s43, 1
        %s208 = scalar_lea.sflag [#allocation3], %s207
        %s209 = sand.u32 %s43, 1
        %s210 = smul.addr %s209, 256
        %s211 = scalar_lea.vmem [#allocation2], %s210
        %p212 = pneg %p56
        %p213 = pneg %p53
        %p214 = pneg %p77
        %p215 = pneg %p74
        %p216 = pneg %p98
        %p217 = pneg %p95
        %p218 = pneg %p124
        %p219 = pneg %p121
        %s220 = sand.u32 %s111, 1
        %s221 = scalar_lea.sflag [#allocation4], %s220
        %s222 = sand.u32 %s111, 1
        %s223 = smul.addr %s222, 128
        %s224 = scalar_lea.vmem [#allocation7], %s223
        %s225 = smul.u32 16, %s25
        %s226 = smul.u32 2, %s26
        %s227 = smul.u32 16, %s25
        %p228 = scmp.eq.s32.totalorder %s26, 0
        // Predicated region
        $region41: #{tpu_custom_call.1} parent=31 // pred_check
          %p229 = pneg %p228
        $region42: #{tpu_custom_call.1} parent=31 // pred_check_branch
          %231 = sbr.rel (%p229) target = $region44
        $region43: #{tpu_custom_call.1} parent=31 // pred_region
          %232 = vst [vmem:[%s224] sm:$0xff] 0.0
          %233 = vst [vmem:[%s224 + $0x8] sm:$0xff] 0.0
          %234 = vst [vmem:[%s224 + $0x10] sm:$0xff] 0.0
          %235 = vst [vmem:[%s224 + $0x18] sm:$0xff] 0.0
          %236 = vst [vmem:[%s224 + $0x20] sm:$0xff] 0.0
          %237 = vst [vmem:[%s224 + $0x28] sm:$0xff] 0.0
          %238 = vst [vmem:[%s224 + $0x30] sm:$0xff] 0.0
          %239 = vst [vmem:[%s224 + $0x38] sm:$0xff] 0.0
          %240 = vst [vmem:[%s224 + $0x40] sm:$0xff] 0.0
          %241 = vst [vmem:[%s224 + $0x48] sm:$0xff] 0.0
          %242 = vst [vmem:[%s224 + $0x50] sm:$0xff] 0.0
          %243 = vst [vmem:[%s224 + $0x58] sm:$0xff] 0.0
          %244 = vst [vmem:[%s224 + $0x60] sm:$0xff] 0.0
          %245 = vst [vmem:[%s224 + $0x68] sm:$0xff] 0.0
          %246 = vst [vmem:[%s224 + $0x70] sm:$0xff] 0.0
          %247 = vst [vmem:[%s224 + $0x78] sm:$0xff] 0.0
        $region44: #{tpu_custom_call.1} parent=31 // pred_fallthru
          _
        %v248 = vld [vmem:[%s196] sm:$0xff]
        %v249 = vld [vmem:[%s196 + $0x8] sm:$0xff]
        %v250 = vld [vmem:[%s196 + $0x10] sm:$0xff]
        %v251 = vld [vmem:[%s196 + $0x18] sm:$0xff]
        %v252 = vld [vmem:[%s196 + $0x20] sm:$0xff]
        %v253 = vld [vmem:[%s196 + $0x28] sm:$0xff]
        %v254 = vld [vmem:[%s196 + $0x30] sm:$0xff]
        %v255 = vld [vmem:[%s196 + $0x38] sm:$0xff]
        %v256 = vld [vmem:[%s196 + $0x40] sm:$0xff]
        %v257 = vld [vmem:[%s196 + $0x48] sm:$0xff]
        %v258 = vld [vmem:[%s196 + $0x50] sm:$0xff]
        %v259 = vld [vmem:[%s196 + $0x58] sm:$0xff]
        %v260 = vld [vmem:[%s196 + $0x60] sm:$0xff]
        %v261 = vld [vmem:[%s196 + $0x68] sm:$0xff]
        %v262 = vld [vmem:[%s196 + $0x70] sm:$0xff]
        %v263 = vld [vmem:[%s196 + $0x78] sm:$0xff]
        %v264 = vld [vmem:[%s196 + $0x80] sm:$0xff]
        %v265 = vld [vmem:[%s196 + $0x88] sm:$0xff]
        %v266 = vld [vmem:[%s196 + $0x90] sm:$0xff]
        %v267 = vld [vmem:[%s196 + $0x98] sm:$0xff]
        %v268 = vld [vmem:[%s196 + $0xa0] sm:$0xff]
        %v269 = vld [vmem:[%s196 + $0xa8] sm:$0xff]
        %v270 = vld [vmem:[%s196 + $0xb0] sm:$0xff]
        %v271 = vld [vmem:[%s196 + $0xb8] sm:$0xff]
        %v272 = vld [vmem:[%s196 + $0xc0] sm:$0xff]
        %v273 = vld [vmem:[%s196 + $0xc8] sm:$0xff]
        %v274 = vld [vmem:[%s196 + $0xd0] sm:$0xff]
        %v275 = vld [vmem:[%s196 + $0xd8] sm:$0xff]
        %v276 = vld [vmem:[%s196 + $0xe0] sm:$0xff]
        %v277 = vld [vmem:[%s196 + $0xe8] sm:$0xff]
        %v278 = vld [vmem:[%s196 + $0xf0] sm:$0xff]
        %v279 = vld [vmem:[%s196 + $0xf8] sm:$0xff]
        %v280 = vpack.c.bf16 %v250, %v248
        %v281 = vpack.c.bf16 %v251, %v249
        %v282 = vpack.c.bf16 %v254, %v252
        %v283 = vpack.c.bf16 %v255, %v253
        %v284 = vpack.c.bf16 %v258, %v256
        %v285 = vpack.c.bf16 %v259, %v257
        %v286 = vpack.c.bf16 %v262, %v260
        %v287 = vpack.c.bf16 %v263, %v261
        %v288 = vpack.c.bf16 %v266, %v264
        %v289 = vpack.c.bf16 %v267, %v265
        %v290 = vpack.c.bf16 %v270, %v268
        %v291 = vpack.c.bf16 %v271, %v269
        %v292 = vpack.c.bf16 %v274, %v272
        %v293 = vpack.c.bf16 %v275, %v273
        %v294 = vpack.c.bf16 %v278, %v276
        %v295 = vpack.c.bf16 %v279, %v277
        %s296 = smul.u32 %s26, 256
        %s297 = sshra.s32 %s296, 3
        %s298 = sand.u32 %s296, 7
        %s299 = smul.addr %s297, 4
        %s300 = scalar_lea.vmem [#allocation5], %s299
        %v301 = vld [vmem:[%s300] sm:$0xf]
        %v302 = vld [vmem:[%s300 + $0x4] sm:$0xf]
        %v303 = vld [vmem:[%s300 + $0x8] sm:$0xf]
        %v304 = vld [vmem:[%s300 + $0xc] sm:$0xf]
        %v305 = vld [vmem:[%s300 + $0x10] sm:$0xf]
        %v306 = vld [vmem:[%s300 + $0x14] sm:$0xf]
        %v307 = vld [vmem:[%s300 + $0x18] sm:$0xf]
        %v308 = vld [vmem:[%s300 + $0x1c] sm:$0xf]
        %v309 = vld [vmem:[%s300 + $0x20] sm:$0xf]
        %v310 = vld [vmem:[%s300 + $0x24] sm:$0xf]
        %v311 = vld [vmem:[%s300 + $0x28] sm:$0xf]
        %v312 = vld [vmem:[%s300 + $0x2c] sm:$0xf]
        %v313 = vld [vmem:[%s300 + $0x30] sm:$0xf]
        %v314 = vld [vmem:[%s300 + $0x34] sm:$0xf]
        %v315 = vld [vmem:[%s300 + $0x38] sm:$0xf]
        %v316 = vld [vmem:[%s300 + $0x3c] sm:$0xf]
        %v317 = vld [vmem:[%s300 + $0x40] sm:$0xf]
        %v318 = vld [vmem:[%s300 + $0x44] sm:$0xf]
        %v319 = vld [vmem:[%s300 + $0x48] sm:$0xf]
        %v320 = vld [vmem:[%s300 + $0x4c] sm:$0xf]
        %v321 = vld [vmem:[%s300 + $0x50] sm:$0xf]
        %v322 = vld [vmem:[%s300 + $0x54] sm:$0xf]
        %v323 = vld [vmem:[%s300 + $0x58] sm:$0xf]
        %v324 = vld [vmem:[%s300 + $0x5c] sm:$0xf]
        %v325 = vld [vmem:[%s300 + $0x60] sm:$0xf]
        %v326 = vld [vmem:[%s300 + $0x64] sm:$0xf]
        %v327 = vld [vmem:[%s300 + $0x68] sm:$0xf]
        %v328 = vld [vmem:[%s300 + $0x6c] sm:$0xf]
        %v329 = vld [vmem:[%s300 + $0x70] sm:$0xf]
        %v330 = vld [vmem:[%s300 + $0x74] sm:$0xf]
        %v331 = vld [vmem:[%s300 + $0x78] sm:$0xf]
        %v332 = vld [vmem:[%s300 + $0x7c] sm:$0xf]
        %v333 = vld [vmem:[%s224] sm:$0xff]
        %v334 = vld [vmem:[%s224 + $0x8] sm:$0xff]
        %v335 = vld [vmem:[%s224 + $0x10] sm:$0xff]
        %v336 = vld [vmem:[%s224 + $0x18] sm:$0xff]
        %v337 = vld [vmem:[%s224 + $0x20] sm:$0xff]
        %v338 = vld [vmem:[%s224 + $0x28] sm:$0xff]
        %v339 = vld [vmem:[%s224 + $0x30] sm:$0xff]
        %v340 = vld [vmem:[%s224 + $0x38] sm:$0xff]
        %v341 = vld [vmem:[%s224 + $0x40] sm:$0xff]
        %v342 = vld [vmem:[%s224 + $0x48] sm:$0xff]
        %v343 = vld [vmem:[%s224 + $0x50] sm:$0xff]
        %v344 = vld [vmem:[%s224 + $0x58] sm:$0xff]
        %v345 = vld [vmem:[%s224 + $0x60] sm:$0xff]
        %v346 = vld [vmem:[%s224 + $0x68] sm:$0xff]
        %v347 = vld [vmem:[%s224 + $0x70] sm:$0xff]
        %v348 = vld [vmem:[%s224 + $0x78] sm:$0xff]
        %v381 = vunpack.c.l.b16 %v301
        %v382 = vunpack.c.l.b16 %v302
        %v383 = vunpack.c.l.b16 %v303
        %v384 = vunpack.c.l.b16 %v304
        %v385 = vunpack.c.l.b16 %v305
        %v386 = vunpack.c.l.b16 %v306
        %v387 = vunpack.c.l.b16 %v307
        %v388 = vunpack.c.l.b16 %v308
        %v389 = vunpack.c.l.b16 %v309
        %v390 = vunpack.c.l.b16 %v310
        %v391 = vunpack.c.l.b16 %v311
        %v392 = vunpack.c.l.b16 %v312
        %v393 = vunpack.c.l.b16 %v313
        %v394 = vunpack.c.l.b16 %v314
        %v395 = vunpack.c.l.b16 %v315
        %v396 = vunpack.c.l.b16 %v316
        %v397 = vunpack.c.l.b16 %v317
        %v398 = vunpack.c.l.b16 %v318
        %v399 = vunpack.c.l.b16 %v319
        %v400 = vunpack.c.l.b16 %v320
        %v401 = vunpack.c.l.b16 %v321
        %v402 = vunpack.c.l.b16 %v322
        %v403 = vunpack.c.l.b16 %v323
        %v404 = vunpack.c.l.b16 %v324
        %v405 = vunpack.c.l.b16 %v325
        %v406 = vunpack.c.l.b16 %v326
        %v407 = vunpack.c.l.b16 %v327
        %v408 = vunpack.c.l.b16 %v328
        %v409 = vunpack.c.l.b16 %v329
        %v410 = vunpack.c.l.b16 %v330
        %v411 = vunpack.c.l.b16 %v331
        %v412 = vunpack.c.l.b16 %v332
        %v413 = vpack.c.b16 %v382, %v381
        %v414 = vpack.c.b16 %v384, %v383
        %v415 = vpack.c.b16 %v386, %v385
        %v416 = vpack.c.b16 %v388, %v387
        %v417 = vpack.c.b16 %v390, %v389
        %v418 = vpack.c.b16 %v392, %v391
        %v419 = vpack.c.b16 %v394, %v393
        %v420 = vpack.c.b16 %v396, %v395
        %v421 = vpack.c.b16 %v398, %v397
        %v422 = vpack.c.b16 %v400, %v399
        %v423 = vpack.c.b16 %v402, %v401
        %v424 = vpack.c.b16 %v404, %v403
        %v425 = vpack.c.b16 %v406, %v405
        %v426 = vpack.c.b16 %v408, %v407
        %v427 = vpack.c.b16 %v410, %v409
        %v428 = vpack.c.b16 %v412, %v411
        %445 = vmatpush.bf16.msra.mxu0 %v420
        %446 = vmatpush.bf16.msra.mxu0 %v419
        %447 = vmatpush.bf16.msra.mxu0 %v418
        %448 = vmatpush.bf16.msra.mxu0 %v417
        %449 = vmatpush.bf16.msra.mxu0 %v416
        %450 = vmatpush.bf16.msra.mxu0 %v415
        %451 = vmatpush.bf16.msra.mxu0 %v414
        %452 = vmatpush.bf16.msra.mxu0 %v413
        %453 = vmatmul.bf16.gmra.mxu0 %v280
        %v454 = vpop.f32.mrf.mxu0
        %v455 = vadd.f32 0.0, %v454
        %v456 = vpop.f32.mrf.mxu0
        %v457 = vadd.f32 0.0, %v456
        %458 = vmatmul.bf16.gmra.mxu0 %v282
        %v459 = vpop.f32.mrf.mxu0
        %v460 = vadd.f32 0.0, %v459
        %v461 = vpop.f32.mrf.mxu0
        %v462 = vadd.f32 0.0, %v461
        %463 = vmatmul.bf16.gmra.mxu0 %v284
        %v464 = vpop.f32.mrf.mxu0
        %v465 = vadd.f32 0.0, %v464
        %v466 = vpop.f32.mrf.mxu0
        %v467 = vadd.f32 0.0, %v466
        %468 = vmatmul.bf16.gmra.mxu0 %v286
        %v469 = vpop.f32.mrf.mxu0
        %v470 = vadd.f32 0.0, %v469
        %v471 = vpop.f32.mrf.mxu0
        %v472 = vadd.f32 0.0, %v471
        %473 = vmatmul.bf16.gmra.mxu0 %v288
        %v474 = vpop.f32.mrf.mxu0
        %v475 = vadd.f32 0.0, %v474
        %v476 = vpop.f32.mrf.mxu0
        %v477 = vadd.f32 0.0, %v476
        %478 = vmatmul.bf16.gmra.mxu0 %v290
        %v479 = vpop.f32.mrf.mxu0
        %v480 = vadd.f32 0.0, %v479
        %v481 = vpop.f32.mrf.mxu0
        %v482 = vadd.f32 0.0, %v481
        %483 = vmatmul.bf16.gmra.mxu0 %v292
        %v484 = vpop.f32.mrf.mxu0
        %v485 = vadd.f32 0.0, %v484
        %v486 = vpop.f32.mrf.mxu0
        %v487 = vadd.f32 0.0, %v486
        %488 = vmatmul.bf16.gmra.mxu0 %v294
        %v489 = vpop.f32.mrf.mxu0
        %v490 = vadd.f32 0.0, %v489
        %v491 = vpop.f32.mrf.mxu0
        %v492 = vadd.f32 0.0, %v491
        %493 = vdwg.mxu0
        %494 = vmatpush.bf16.msra.mxu0 %v428
        %495 = vmatpush.bf16.msra.mxu0 %v427
        %496 = vmatpush.bf16.msra.mxu0 %v426
        %497 = vmatpush.bf16.msra.mxu0 %v425
        %498 = vmatpush.bf16.msra.mxu0 %v424
        %499 = vmatpush.bf16.msra.mxu0 %v423
        %500 = vmatpush.bf16.msra.mxu0 %v422
        %501 = vmatpush.bf16.msra.mxu0 %v421
        %502 = vmatmul.bf16.gmra.mxu0 %v281
        %v503 = vpop.f32.mrf.mxu0
        %v504 = vadd.f32 %v455, %v503
        %v505 = vpop.f32.mrf.mxu0
        %v506 = vadd.f32 %v457, %v505
        %507 = vmatmul.bf16.gmra.mxu0 %v283
        %v508 = vpop.f32.mrf.mxu0
        %v509 = vadd.f32 %v460, %v508
        %v510 = vpop.f32.mrf.mxu0
        %v511 = vadd.f32 %v462, %v510
        %512 = vmatmul.bf16.gmra.mxu0 %v285
        %v513 = vpop.f32.mrf.mxu0
        %v514 = vadd.f32 %v465, %v513
        %v515 = vpop.f32.mrf.mxu0
        %v516 = vadd.f32 %v467, %v515
        %517 = vmatmul.bf16.gmra.mxu0 %v287
        %v518 = vpop.f32.mrf.mxu0
        %v519 = vadd.f32 %v470, %v518
        %v520 = vpop.f32.mrf.mxu0
        %v521 = vadd.f32 %v472, %v520
        %522 = vmatmul.bf16.gmra.mxu0 %v289
        %v523 = vpop.f32.mrf.mxu0
        %v524 = vadd.f32 %v475, %v523
        %v525 = vpop.f32.mrf.mxu0
        %v526 = vadd.f32 %v477, %v525
        %527 = vmatmul.bf16.gmra.mxu0 %v291
        %v528 = vpop.f32.mrf.mxu0
        %v529 = vadd.f32 %v480, %v528
        %v530 = vpop.f32.mrf.mxu0
        %v531 = vadd.f32 %v482, %v530
        %532 = vmatmul.bf16.gmra.mxu0 %v293
        %v533 = vpop.f32.mrf.mxu0
        %v534 = vadd.f32 %v485, %v533
        %v535 = vpop.f32.mrf.mxu0
        %v536 = vadd.f32 %v487, %v535
        %537 = vmatmul.bf16.gmra.mxu0 %v295
        %v538 = vpop.f32.mrf.mxu0
        %v539 = vadd.f32 %v490, %v538
        %v540 = vpop.f32.mrf.mxu0
        %v541 = vadd.f32 %v492, %v540
        %542 = vdwg.mxu0
        %v543 = vadd.f32 %v333, %v504
        %v544 = vadd.f32 %v334, %v506
        %v545 = vadd.f32 %v335, %v509
        %v546 = vadd.f32 %v336, %v511
        %v547 = vadd.f32 %v337, %v514
        %v548 = vadd.f32 %v338, %v516
        %v549 = vadd.f32 %v339, %v519
        %v550 = vadd.f32 %v340, %v521
        %v551 = vadd.f32 %v341, %v524
        %v552 = vadd.f32 %v342, %v526
        %v553 = vadd.f32 %v343, %v529
        %v554 = vadd.f32 %v344, %v531
        %v555 = vadd.f32 %v345, %v534
        %v556 = vadd.f32 %v346, %v536
        %v557 = vadd.f32 %v347, %v539
        %v558 = vadd.f32 %v348, %v541
        %559 = vst [vmem:[%s224] sm:$0xff] %v543
        %560 = vst [vmem:[%s224 + $0x8] sm:$0xff] %v544
        %561 = vst [vmem:[%s224 + $0x10] sm:$0xff] %v545
        %562 = vst [vmem:[%s224 + $0x18] sm:$0xff] %v546
        %563 = vst [vmem:[%s224 + $0x20] sm:$0xff] %v547
        %564 = vst [vmem:[%s224 + $0x28] sm:$0xff] %v548
        %565 = vst [vmem:[%s224 + $0x30] sm:$0xff] %v549
        %566 = vst [vmem:[%s224 + $0x38] sm:$0xff] %v550
        %567 = vst [vmem:[%s224 + $0x40] sm:$0xff] %v551
        %568 = vst [vmem:[%s224 + $0x48] sm:$0xff] %v552
        %569 = vst [vmem:[%s224 + $0x50] sm:$0xff] %v553
        %570 = vst [vmem:[%s224 + $0x58] sm:$0xff] %v554
        %571 = vst [vmem:[%s224 + $0x60] sm:$0xff] %v555
        %572 = vst [vmem:[%s224 + $0x68] sm:$0xff] %v556
        %573 = vst [vmem:[%s224 + $0x70] sm:$0xff] %v557
        %574 = vst [vmem:[%s224 + $0x78] sm:$0xff] %v558
        // Predicated region
        $region45: #{tpu_custom_call.1} parent=31 // pred_check
          %p575 = pneg %p228
        $region46: #{tpu_custom_call.1} parent=31 // pred_check_branch
          %577 = sbr.rel (%p575) target = $region48
        $region47: #{tpu_custom_call.1} parent=31 // pred_region
          %v578 = vld [vmem:[%s224] sm:$0xff]
          %v579 = vld [vmem:[%s224 + $0x8] sm:$0xff]
          %v580 = vld [vmem:[%s224 + $0x10] sm:$0xff]
          %v581 = vld [vmem:[%s224 + $0x18] sm:$0xff]
          %v582 = vld [vmem:[%s224 + $0x20] sm:$0xff]
          %v583 = vld [vmem:[%s224 + $0x28] sm:$0xff]
          %v584 = vld [vmem:[%s224 + $0x30] sm:$0xff]
          %v585 = vld [vmem:[%s224 + $0x38] sm:$0xff]
          %v586 = vld [vmem:[%s224 + $0x40] sm:$0xff]
          %v587 = vld [vmem:[%s224 + $0x48] sm:$0xff]
          %v588 = vld [vmem:[%s224 + $0x50] sm:$0xff]
          %v589 = vld [vmem:[%s224 + $0x58] sm:$0xff]
          %v590 = vld [vmem:[%s224 + $0x60] sm:$0xff]
          %v591 = vld [vmem:[%s224 + $0x68] sm:$0xff]
          %v592 = vld [vmem:[%s224 + $0x70] sm:$0xff]
          %v593 = vld [vmem:[%s224 + $0x78] sm:$0xff]
          %v594 = vld [vmem:[%s2] sm:$0x1]
          %v596 = vperm.slane %v594, 0
          %v598 = vadd.f32 %v578, %v596
          %v599 = vadd.f32 %v579, %v596
          %v600 = vadd.f32 %v580, %v596
          %v601 = vadd.f32 %v581, %v596
          %v602 = vadd.f32 %v582, %v596
          %v603 = vadd.f32 %v583, %v596
          %v604 = vadd.f32 %v584, %v596
          %v605 = vadd.f32 %v585, %v596
          %v606 = vadd.f32 %v586, %v596
          %v607 = vadd.f32 %v587, %v596
          %v608 = vadd.f32 %v588, %v596
          %v609 = vadd.f32 %v589, %v596
          %v610 = vadd.f32 %v590, %v596
          %v611 = vadd.f32 %v591, %v596
          %v612 = vadd.f32 %v592, %v596
          %v613 = vadd.f32 %v593, %v596
          %v614 = vmax.f32 %v598, 0.0
          %v615 = vmax.f32 %v599, 0.0
          %v616 = vmax.f32 %v600, 0.0
          %v617 = vmax.f32 %v601, 0.0
          %v618 = vmax.f32 %v602, 0.0
          %v619 = vmax.f32 %v603, 0.0
          %v620 = vmax.f32 %v604, 0.0
          %v621 = vmax.f32 %v605, 0.0
          %v622 = vmax.f32 %v606, 0.0
          %v623 = vmax.f32 %v607, 0.0
          %v624 = vmax.f32 %v608, 0.0
          %v625 = vmax.f32 %v609, 0.0
          %v626 = vmax.f32 %v610, 0.0
          %v627 = vmax.f32 %v611, 0.0
          %v628 = vmax.f32 %v612, 0.0
          %v629 = vmax.f32 %v613, 0.0
          %630 = vst [vmem:[%s224] sm:$0xff] %v614
          %631 = vst [vmem:[%s224 + $0x8] sm:$0xff] %v615
          %632 = vst [vmem:[%s224 + $0x10] sm:$0xff] %v616
          %633 = vst [vmem:[%s224 + $0x18] sm:$0xff] %v617
          %634 = vst [vmem:[%s224 + $0x20] sm:$0xff] %v618
          %635 = vst [vmem:[%s224 + $0x28] sm:$0xff] %v619
          %636 = vst [vmem:[%s224 + $0x30] sm:$0xff] %v620
          %637 = vst [vmem:[%s224 + $0x38] sm:$0xff] %v621
          %638 = vst [vmem:[%s224 + $0x40] sm:$0xff] %v622
          %639 = vst [vmem:[%s224 + $0x48] sm:$0xff] %v623
          %640 = vst [vmem:[%s224 + $0x50] sm:$0xff] %v624
          %641 = vst [vmem:[%s224 + $0x58] sm:$0xff] %v625
          %642 = vst [vmem:[%s224 + $0x60] sm:$0xff] %v626
          %643 = vst [vmem:[%s224 + $0x68] sm:$0xff] %v627
          %644 = vst [vmem:[%s224 + $0x70] sm:$0xff] %v628
          %645 = vst [vmem:[%s224 + $0x78] sm:$0xff] %v629
        $region48: #{tpu_custom_call.1} parent=31 // pred_fallthru
          _
        %s646 = sand.u32 %s111, 1
        %s647 = scalar_lea.sflag [#allocation4], %s646
        %s648 = sand.u32 %s111, 1
        %s649 = smul.addr %s648, 128
        %s650 = scalar_lea.vmem [#allocation7], %s649
        // Predicated region
        $region49: #{tpu_custom_call.1} parent=31 // pred_check
          %p651 = pneg %p121
        $region50: #{tpu_custom_call.1} parent=31 // pred_check_branch
          %653 = sbr.rel (%p651) target = $region52
        $region51: #{tpu_custom_call.1} parent=31 // pred_region
          %s654 = smul.u32 16, %s25
          %656 = vsyncadd %s647, 0
          %s657 = smul.addr %s654, 8
          %s658 = scalar_lea.hbm %s3, %s657
          %s659 = sshll.u32 %s650, 4
          %s660 = int_to_ptr.vmem [resolvable:$true] %s659
          %s661 = sshll.u32 %s658, 4
          %s662 = int_to_ptr.hbm [resolvable:$true] %s661
          %667 = dma.vmem_to_hbm [thread:$0]  %s660, 2048, %s662, %s647, 128, 128, 8
        $region52: #{tpu_custom_call.1} parent=31 // pred_fallthru
          _
      $region32: #{tpu_custom_call.1} parent=5 // pred_fallthru
        _
      %p668 = scmp.le.s32.totalorder 2, %s16
      // Predicated region
      $region53: #{tpu_custom_call.1} parent=5 // pred_check
        %p669 = pneg %p668
      $region54: #{tpu_custom_call.1} parent=5 // pred_check_branch
        %671 = sbr.rel (%p669) target = $region56
      $region55: #{tpu_custom_call.1} parent=5 // pred_region
        %s672 = ssub.s32 %s16, 2
        // Predicated region
        $region57: #{tpu_custom_call.1} parent=55 // pred_check
          %p673 = pneg %p127
        $region58: #{tpu_custom_call.1} parent=55 // pred_check_branch
          %675 = sbr.rel (%p673) target = $region60
        $region59: #{tpu_custom_call.1} parent=55 // pred_region
          %s676 = sand.u32 %s112, 1
          %s677 = scalar_lea.sflag [#allocation4], %s676
          %s678 = sand.u32 %s112, 1
          %s679 = smul.addr %s678, 128
          %s680 = scalar_lea.vmem [#allocation7], %s679
          %682 = dma.done %s677, 2048
        $region60: #{tpu_custom_call.1} parent=55 // pred_fallthru
          _
      $region56: #{tpu_custom_call.1} parent=5 // pred_fallthru
        _
    $region6: #{tpu_custom_call.1} parent=1 // loop_footer
      %s20 = sadd.s32 1, %s16
    $region7: #{tpu_custom_call.1} parent=1 // loop_footer_branch
      %15 = sbr.rel target = $region3
    $region8: #{tpu_custom_call.1} parent=1 // loop_exit
      _
    %683 = vsyncpa [#allocation3], 1
    %s684 = scalar_lea.sflag [#allocation3], 1
    %685 = vsyncpa %s684, 1
    %686 = vsyncpa [#allocation6], 1
    %687 = vsyncpa [#allocation4], 1
    %s688 = scalar_lea.sflag [#allocation4], 1
    %689 = vsyncpa %s688, 1

</llo_original>
